<compile_context>
chip_gen: v5e
topology: v5e:2x2
jax: 0.10.0
libtpu: 0.0.40
codegen_flags: <defaults>
</compile_context>

<pallas_src>
import numpy as np
import jax
import jax.numpy as jnp
from jax import lax
from jax.experimental import pallas as pl
from jax.experimental.pallas import tpu as pltpu


# ----- f32-grade lgamma: NR g=5, 6-term Lanczos as a single rational --------
_NR_C0 = 1.000000000190015
_NR_COF = (76.18009172947146, -86.50532032941677, 24.01409824083091,
           -1.231739572450155, 0.1208650973866179e-2, -0.5395239384953e-5)
_SQRT_2PI = 2.5066282746310005
_LG_SCALE = 1.0 / 256.0     # evaluate in u = x/256 so u**7 stays inside f32 range


def _build_lgamma_rational():
    """ser(x)/x = P(x)/D(x): P deg 6, D(x) = x * prod_j (x+j) deg 7, coeffs in u=x*s."""
    q = np.array([1.0])
    for j in range(1, 7):
        q = np.polymul(q, [1.0, float(j)])              # prod_j (x + j), deg 6
    p = _NR_C0 * q
    for i, c in enumerate(_NR_COF, start=1):
        qi = np.array([1.0])
        for j in range(1, 7):
            if j != i:
                qi = np.polymul(qi, [1.0, float(j)])    # q(x) / (x + i), deg 5
        p = np.polyadd(p, c * qi)
    d = np.polymul(q, [1.0, 0.0])                       # x * q(x), deg 7
    s = _LG_SCALE
    num = tuple(float(c) * s ** k for k, c in enumerate(p))
    den = tuple(float(c) * s ** k for k, c in enumerate(d))
    return num, den


_LG_NUM, _LG_DEN = _build_lgamma_rational()
_LG_CONST = _SQRT_2PI * _LG_SCALE       # s**(7-6) prefactor folded into sqrt(2*pi)


def _horner(u, coeffs):
    acc = u * coeffs[0] + coeffs[1]     # no full_like splat
    for c in coeffs[2:]:
        acc = acc * u + c
    return acc


def _lgamma_pos(x):
    """lgamma(x) for x > 0: 13 Horner mul/adds (VALU) + 1 div + 2 logs (EUP)."""
    u = x * _LG_SCALE
    rat = _horner(u, _LG_NUM) / _horner(u, _LG_DEN)
    t = x + 5.5
    return (x + 0.5) * jnp.log(t) - t + jnp.log(_LG_CONST * rat)


# ----- kernel 1: K <= 128, batch rows packed into lanes ----------------------
def _packed_kernel(seg, k_valid):
    """Blocks are (tbr, 128); each 128-lane row packs r = 128//seg batch rows,
    each occupying `seg` lanes of which the first `k_valid` are real classes."""
    r = 128 // seg

    def kernel(alpha_ref, value_ref, out_ref):
        alpha = alpha_ref[...].astype(jnp.float32)       # (tbr, 128), lane-dense
        value = value_ref[...].astype(jnp.float32)
        elem = (alpha - 1.0) * jnp.log(value) - _lgamma_pos(alpha)

        # 0/1 segment-selection matrix; pad lanes (>= k_valid) are excluded.
        lane = lax.broadcasted_iota(jnp.int32, (128, r), 0)
        col = lax.broadcasted_iota(jnp.int32, (128, r), 1)
        sel = ((lane >= col * seg) & (lane < col * seg + k_valid)).astype(jnp.float32)

        # Per-batch-row sums on the otherwise-idle MXU (exact: weights are 1/0).
        sum_elem = jnp.dot(elem, sel, precision=lax.Precision.HIGHEST,
                           preferred_element_type=jnp.float32)       # (tbr, r)
        sum_alpha = jnp.dot(alpha, sel, precision=lax.Precision.HIGHEST,
                            preferred_element_type=jnp.float32)      # (tbr, r)
        # TODO(synk): pack the r-wide per-row sums densely before this lgamma to
        # avoid evaluating it on a lane-sparse (tbr, r) tile.
        out_ref[...] = sum_elem + _lgamma_pos(sum_alpha)

    return kernel


# ----- kernel 2: K > 128, trailing "arbitrary" K grid axis -------------------
def _wide_kernel(k_total, kblk):
    needs_mask = (k_total % kblk) != 0

    def kernel(alpha_ref, value_ref, out_ref, acc_e_ref, acc_a_ref):
        k = pl.program_id(1)

        @pl.when(k == 0)
        def _():
            acc_e_ref[...] = jnp.zeros_like(acc_e_ref)
            acc_a_ref[...] = jnp.zeros_like(acc_a_ref)

        alpha = alpha_ref[...].astype(jnp.float32)       # (tbr, kblk)
        value = value_ref[...].astype(jnp.float32)
        elem = (alpha - 1.0) * jnp.log(value) - _lgamma_pos(alpha)
        if needs_mask:                                   # ragged last K block
            lane = lax.broadcasted_iota(jnp.int32, elem.shape, 1) + k * kblk
            valid = lane < k_total
            elem = jnp.where(valid, elem, 0.0)
            alpha = jnp.where(valid, alpha, 0.0)
        acc_e_ref[...] += jnp.sum(elem, axis=-1, keepdims=True)
        acc_a_ref[...] += jnp.sum(alpha, axis=-1, keepdims=True)

        @pl.when(k == pl.num_programs(1) - 1)
        def _():
            out_ref[...] = acc_e_ref[...] + _lgamma_pos(acc_a_ref[...])

    return kernel


# ----- wrapper ----------------------------------------------------------------
def _round_up(x, m):
    return -(-x // m) * m


def _next_pow2(x):
    return 1 << max(0, int(x - 1).bit_length())


def _choose_block_rows(num_rows, bytes_per_row):
    # 2 inputs x 2 pipeline buffers (input dtype) + ~6 f32 temporaries per tile,
    # ~10 MiB target footprint: under v5e's 16 MiB scoped default, far under
    # v7x's 64 MiB physical VMEM.
    budget = 10 * 1024 * 1024
    rows = min(budget // max(1, bytes_per_row), _round_up(num_rows, 8))
    rows = max(8, rows // 8 * 8)
    # Prefer >=4 grid steps when the batch allows it so v7x's two TensorCores
    # each get >=2 pipelined steps (per-step overhead is only ~0.35 us).
    while num_rows // rows < 4 and rows > 8:
        rows = max(8, (rows // 2 + 7) // 8 * 8)
    return rows


_CP_1D = pltpu.CompilerParams(dimension_semantics=("parallel",),
                              vmem_limit_bytes=48 * 1024 * 1024)
_CP_2D = pltpu.CompilerParams(dimension_semantics=("parallel", "arbitrary"),
                              vmem_limit_bytes=48 * 1024 * 1024)


def _log_prob_small_k(alpha, value, block_rows):
    B, K = alpha.shape
    itemsize = max(jnp.dtype(alpha.dtype).itemsize, jnp.dtype(value.dtype).itemsize)
    seg = _next_pow2(K)            # lane-segment width, divides 128
    r = 128 // seg                 # batch rows packed per 128-lane row
    bp = _round_up(B, r)
    if bp != B or seg != K:
        # Single pad pass only when K is not a power of two or B % r != 0; pad
        # lanes/rows are neutral and excluded from the sums by `sel`.
        pad = ((0, bp - B), (0, seg - K))
        alpha = jnp.pad(alpha, pad, constant_values=1.0)
        value = jnp.pad(value, pad, constant_values=1.0)
    bg = bp // r
    alpha_p = alpha.reshape(bg, 128)       # free row-major bitcasts
    value_p = value.reshape(bg, 128)

    tbr = block_rows or _choose_block_rows(bg, 128 * (4 * itemsize + 24))
    out = pl.pallas_call(
        _packed_kernel(seg, K),
        out_shape=jax.ShapeDtypeStruct((bg, r), jnp.float32),
        grid_spec=pltpu.PrefetchScalarGridSpec(
            num_scalar_prefetch=0,
            grid=(pl.cdiv(bg, tbr),),
            in_specs=[pl.BlockSpec((tbr, 128), lambda i: (i, 0)),
                      pl.BlockSpec((tbr, 128), lambda i: (i, 0))],
            out_specs=pl.BlockSpec((tbr, r), lambda i: (i, 0))),
        compiler_params=_CP_1D,
    )(alpha_p, value_p)
    return out.reshape(bp)[:B]


def _log_prob_large_k(alpha, value, block_rows, block_cols):
    B, K = alpha.shape
    itemsize = max(jnp.dtype(alpha.dtype).itemsize, jnp.dtype(value.dtype).itemsize)
    kblk = block_cols or min(512, _round_up(K, 128))
    tbr = block_rows or _choose_block_rows(B, kblk * (4 * itemsize + 24))
    out = pl.pallas_call(
        _wide_kernel(K, kblk),
        out_shape=jax.ShapeDtypeStruct((B, 1), jnp.float32),
        grid_spec=pltpu.PrefetchScalarGridSpec(
            num_scalar_prefetch=0,
            grid=(pl.cdiv(B, tbr), pl.cdiv(K, kblk)),
            in_specs=[pl.BlockSpec((tbr, kblk), lambda i, k: (i, k)),
                      pl.BlockSpec((tbr, kblk), lambda i, k: (i, k))],
            out_specs=pl.BlockSpec((tbr, 1), lambda i, k: (i, 0)),
            scratch_shapes=[pltpu.VMEM((tbr, 1), jnp.float32),
                            pltpu.VMEM((tbr, 1), jnp.float32)]),
        compiler_params=_CP_2D,
    )(alpha, value)
    return out.reshape(B)


def dirichlet_log_prob(alpha, value, *, block_rows=None, block_cols=None):
    """Pallas TPU Dirichlet(alpha).log_prob(value); alpha, value: (..., K)."""
    assert alpha.shape == value.shape and alpha.ndim >= 1
    *batch_shape, K = alpha.shape
    B = 1
    for d in batch_shape:
        B *= int(d)
    alpha2 = alpha.reshape(B, K)
    value2 = value.reshape(B, K)
    if K <= 128:
        out = _log_prob_small_k(alpha2, value2, block_rows)
    else:
        out = _log_prob_large_k(alpha2, value2, block_rows, block_cols)
    return out.reshape(tuple(batch_shape))


def dirichlet_mean(alpha):
    # TODO(synk): trivial elementwise helper off the forward() hot path.
    return alpha / jnp.sum(alpha, axis=-1, keepdims=True)


# ----- reference (pure JAX) ----------------------------------------------------
def _dirichlet_log_prob_ref(alpha, value):
    return (jnp.sum((alpha - 1.0) * jnp.log(value), axis=-1)
            + jax.scipy.special.gammaln(jnp.sum(alpha, axis=-1))
            - jnp.sum(jax.scipy.special.gammaln(alpha), axis=-1))


if __name__ == "__main__":
    key = jax.random.PRNGKey(0)
    k_a, k_v, k_aw, k_al, k_vl = jax.random.split(key, 5)

    B, K = 8, 16  # batch=8 rows, num_classes=16

    alpha = jax.random.uniform(k_a, (B, K), jnp.float32, minval=0.5, maxval=3.0)
    value = jax.nn.softmax(jax.random.normal(k_v, (B, K), jnp.float32), axis=-1)

    out = jax.block_until_ready(dirichlet_log_prob(alpha, value))
    ref = _dirichlet_log_prob_ref(alpha, value)
    assert out.shape == (B,)
    assert jnp.allclose(out, ref, rtol=1e-3, atol=1e-3), (out, ref)

    # Wider concentration range (lgamma accuracy check).
    alpha_w = jax.random.uniform(k_aw, (B, K), jnp.float32, minval=0.1, maxval=20.0)
    out_w = jax.block_until_ready(dirichlet_log_prob(alpha_w, value))
    ref_w = _dirichlet_log_prob_ref(alpha_w, value)
    assert jnp.allclose(out_w, ref_w, rtol=1e-3, atol=1e-2), (out_w, ref_w)

    # Large-K path: trailing "arbitrary" K grid axis with VMEM accumulators and
    # in-kernel masking of the ragged last K block (300 classes, 128-wide blocks).
    KL = 300
    alpha_l = jax.random.uniform(k_al, (B, KL), jnp.float32, minval=0.5, maxval=3.0)
    value_l = jax.nn.softmax(jax.random.normal(k_vl, (B, KL), jnp.float32), axis=-1)
    out_l = jax.block_until_ready(
        dirichlet_log_prob(alpha_l, value_l, block_cols=128))
    ref_l = _dirichlet_log_prob_ref(alpha_l, value_l)
    assert out_l.shape == (B,)
    assert jnp.allclose(out_l, ref_l, rtol=1e-3, atol=1e-2), (out_l, ref_l)

    # TODO(synk): SmoothOneHot (scatter + smoothing) is a trivial helper off the
    # forward() hot path; forward() (log_prob) is what is kernelized.
    print("KERNEL_OK")
</pallas_src>

<mosaic_0001>
module attributes {stable_mosaic.version = 11 : i64} {
  func.func @kernel(%arg0: i32, %arg1: memref<8x128xf32, #tpu.memory_space<vmem>>, %arg2: memref<8x128xf32, #tpu.memory_space<vmem>>, %arg3: memref<8x8xf32, #tpu.memory_space<vmem>>) attributes {dimension_semantics = [#tpu.dimension_semantics<parallel>], iteration_bounds = array<i64: 1>, scalar_prefetch = 0 : i64, scratch_operands = 0 : i64, tpu.core_type = #tpu.core_type<tc>, window_params = [{transform_indices = @transform_0, window_bounds = array<i64: 8, 128>}, {transform_indices = @transform_1, window_bounds = array<i64: 8, 128>}, {transform_indices = @transform_2, window_bounds = array<i64: 8, 8>}]} {
    %c0 = arith.constant 0 : index
    %c0_0 = arith.constant 0 : index
    %0 = vector.load %arg1[%c0, %c0_0] : memref<8x128xf32, #tpu.memory_space<vmem>>, vector<8x128xf32>
    %c0_1 = arith.constant 0 : index
    %c0_2 = arith.constant 0 : index
    %1 = vector.load %arg2[%c0_1, %c0_2] : memref<8x128xf32, #tpu.memory_space<vmem>>, vector<8x128xf32>
    %cst = arith.constant 1.000000e+00 : f32
    %2 = vector.broadcast %cst : f32 to vector<8x128xf32>
    %3 = arith.subf %0, %2 : vector<8x128xf32>
    %4 = math.log %1 : vector<8x128xf32>
    %5 = arith.mulf %3, %4 : vector<8x128xf32>
    %cst_3 = arith.constant 3.906250e-03 : f32
    %6 = vector.broadcast %cst_3 : f32 to vector<8x128xf32>
    %7 = arith.mulf %0, %6 : vector<8x128xf32>
    %cst_4 = arith.constant 1.000000e+00 : f32
    %8 = vector.broadcast %cst_4 : f32 to vector<8x128xf32>
    %9 = arith.mulf %7, %8 : vector<8x128xf32>
    %cst_5 = arith.constant 0.13069661 : f32
    %10 = vector.broadcast %cst_5 : f32 to vector<8x128xf32>
    %11 = arith.addf %9, %10 : vector<8x128xf32>
    %12 = arith.mulf %11, %7 : vector<8x128xf32>
    %cst_6 = arith.constant 0.00711569516 : f32
    %13 = vector.broadcast %cst_6 : f32 to vector<8x128xf32>
    %14 = arith.addf %12, %13 : vector<8x128xf32>
    %15 = arith.mulf %14, %7 : vector<8x128xf32>
    %cst_7 = arith.constant 2.06572382E-4 : f32
    %16 = vector.broadcast %cst_7 : f32 to vector<8x128xf32>
    %17 = arith.addf %15, %16 : vector<8x128xf32>
    %18 = arith.mulf %17, %7 : vector<8x128xf32>
    %cst_8 = arith.constant 3.37253186E-6 : f32
    %19 = vector.broadcast %cst_8 : f32 to vector<8x128xf32>
    %20 = arith.addf %18, %19 : vector<8x128xf32>
    %21 = arith.mulf %20, %7 : vector<8x128xf32>
    %cst_9 = arith.constant 2.93594571E-8 : f32
    %22 = vector.broadcast %cst_9 : f32 to vector<8x128xf32>
    %23 = arith.addf %21, %22 : vector<8x128xf32>
    %24 = arith.mulf %23, %7 : vector<8x128xf32>
    %cst_10 = arith.constant 1.06473386E-10 : f32
    %25 = vector.broadcast %cst_10 : f32 to vector<8x128xf32>
    %26 = arith.addf %24, %25 : vector<8x128xf32>
    %cst_11 = arith.constant 1.000000e+00 : f32
    %27 = vector.broadcast %cst_11 : f32 to vector<8x128xf32>
    %28 = arith.mulf %7, %27 : vector<8x128xf32>
    %cst_12 = arith.constant 0.08203125 : f32
    %29 = vector.broadcast %cst_12 : f32 to vector<8x128xf32>
    %30 = arith.addf %28, %29 : vector<8x128xf32>
    %31 = arith.mulf %30, %7 : vector<8x128xf32>
    %cst_13 = arith.constant 0.00267028809 : f32
    %32 = vector.broadcast %cst_13 : f32 to vector<8x128xf32>
    %33 = arith.addf %31, %32 : vector<8x128xf32>
    %34 = arith.mulf %33, %7 : vector<8x128xf32>
    %cst_14 = arith.constant 4.38094139E-5 : f32
    %35 = vector.broadcast %cst_14 : f32 to vector<8x128xf32>
    %36 = arith.addf %34, %35 : vector<8x128xf32>
    %37 = arith.mulf %36, %7 : vector<8x128xf32>
    %cst_15 = arith.constant 3.78116965E-7 : f32
    %38 = vector.broadcast %cst_15 : f32 to vector<8x128xf32>
    %39 = arith.addf %37, %38 : vector<8x128xf32>
    %40 = arith.mulf %39, %7 : vector<8x128xf32>
    %cst_16 = arith.constant 1.60434865E-9 : f32
    %41 = vector.broadcast %cst_16 : f32 to vector<8x128xf32>
    %42 = arith.addf %40, %41 : vector<8x128xf32>
    %43 = arith.mulf %42, %7 : vector<8x128xf32>
    %cst_17 = arith.constant 2.55795385E-12 : f32
    %44 = vector.broadcast %cst_17 : f32 to vector<8x128xf32>
    %45 = arith.addf %43, %44 : vector<8x128xf32>
    %46 = arith.mulf %45, %7 : vector<8x128xf32>
    %cst_18 = arith.constant 0.000000e+00 : f32
    %47 = vector.broadcast %cst_18 : f32 to vector<8x128xf32>
    %48 = arith.addf %46, %47 : vector<8x128xf32>
    %49 = arith.divf %26, %48 : vector<8x128xf32>
    %cst_19 = arith.constant 5.500000e+00 : f32
    %50 = vector.broadcast %cst_19 : f32 to vector<8x128xf32>
    %51 = arith.addf %0, %50 : vector<8x128xf32>
    %cst_20 = arith.constant 5.000000e-01 : f32
    %52 = vector.broadcast %cst_20 : f32 to vector<8x128xf32>
    %53 = arith.addf %0, %52 : vector<8x128xf32>
    %54 = math.log %51 : vector<8x128xf32>
    %55 = arith.mulf %53, %54 : vector<8x128xf32>
    %56 = arith.subf %55, %51 : vector<8x128xf32>
    %cst_21 = arith.constant 0.0097915167 : f32
    %57 = vector.broadcast %cst_21 : f32 to vector<8x128xf32>
    %58 = arith.mulf %57, %49 : vector<8x128xf32>
    %59 = math.log %58 : vector<8x128xf32>
    %60 = arith.addf %56, %59 : vector<8x128xf32>
    %61 = arith.subf %5, %60 : vector<8x128xf32>
    %62 = tpu.iota {dimensions = array<i32: 0>} : vector<128x8xi32>
    %63 = tpu.iota {dimensions = array<i32: 1>} : vector<128x8xi32>
    %c16_i32 = arith.constant 16 : i32
    %64 = vector.broadcast %c16_i32 : i32 to vector<128x8xi32>
    %65 = arith.muli %63, %64 : vector<128x8xi32>
    %66 = arith.cmpi sge, %62, %65 : vector<128x8xi32>
    %c16_i32_22 = arith.constant 16 : i32
    %67 = vector.broadcast %c16_i32_22 : i32 to vector<128x8xi32>
    %68 = arith.muli %63, %67 : vector<128x8xi32>
    %c16_i32_23 = arith.constant 16 : i32
    %69 = vector.broadcast %c16_i32_23 : i32 to vector<128x8xi32>
    %70 = arith.addi %68, %69 : vector<128x8xi32>
    %71 = arith.cmpi slt, %62, %70 : vector<128x8xi32>
    %72 = arith.andi %66, %71 : vector<128x8xi1>
    %73 = arith.extui %72 : vector<128x8xi1> to vector<128x8xi32>
    %74 = arith.sitofp %73 : vector<128x8xi32> to vector<128x8xf32>
    %cst_24 = arith.constant dense<0.000000e+00> : vector<8x8xf32>
    %75 = tpu.matmul %61, %74, %cst_24 {dimension_numbers = #tpu.dot_dimension_numbers<[1], [0], [0], [1], [0, 0, 1, 1], [], []>, precision = #tpu.contract_precision<fp32>} : vector<8x128xf32>, vector<128x8xf32>, vector<8x8xf32> -> vector<8x8xf32>
    %cst_25 = arith.constant dense<0.000000e+00> : vector<8x8xf32>
    %76 = tpu.matmul %0, %74, %cst_25 {dimension_numbers = #tpu.dot_dimension_numbers<[1], [0], [0], [1], [0, 0, 1, 1], [], []>, precision = #tpu.contract_precision<fp32>} : vector<8x128xf32>, vector<128x8xf32>, vector<8x8xf32> -> vector<8x8xf32>
    %cst_26 = arith.constant 3.906250e-03 : f32
    %77 = vector.broadcast %cst_26 : f32 to vector<8x8xf32>
    %78 = arith.mulf %76, %77 : vector<8x8xf32>
    %cst_27 = arith.constant 1.000000e+00 : f32
    %79 = vector.broadcast %cst_27 : f32 to vector<8x8xf32>
    %80 = arith.mulf %78, %79 : vector<8x8xf32>
    %cst_28 = arith.constant 0.13069661 : f32
    %81 = vector.broadcast %cst_28 : f32 to vector<8x8xf32>
    %82 = arith.addf %80, %81 : vector<8x8xf32>
    %83 = arith.mulf %82, %78 : vector<8x8xf32>
    %cst_29 = arith.constant 0.00711569516 : f32
    %84 = vector.broadcast %cst_29 : f32 to vector<8x8xf32>
    %85 = arith.addf %83, %84 : vector<8x8xf32>
    %86 = arith.mulf %85, %78 : vector<8x8xf32>
    %cst_30 = arith.constant 2.06572382E-4 : f32
    %87 = vector.broadcast %cst_30 : f32 to vector<8x8xf32>
    %88 = arith.addf %86, %87 : vector<8x8xf32>
    %89 = arith.mulf %88, %78 : vector<8x8xf32>
    %cst_31 = arith.constant 3.37253186E-6 : f32
    %90 = vector.broadcast %cst_31 : f32 to vector<8x8xf32>
    %91 = arith.addf %89, %90 : vector<8x8xf32>
    %92 = arith.mulf %91, %78 : vector<8x8xf32>
    %cst_32 = arith.constant 2.93594571E-8 : f32
    %93 = vector.broadcast %cst_32 : f32 to vector<8x8xf32>
    %94 = arith.addf %92, %93 : vector<8x8xf32>
    %95 = arith.mulf %94, %78 : vector<8x8xf32>
    %cst_33 = arith.constant 1.06473386E-10 : f32
    %96 = vector.broadcast %cst_33 : f32 to vector<8x8xf32>
    %97 = arith.addf %95, %96 : vector<8x8xf32>
    %cst_34 = arith.constant 1.000000e+00 : f32
    %98 = vector.broadcast %cst_34 : f32 to vector<8x8xf32>
    %99 = arith.mulf %78, %98 : vector<8x8xf32>
    %cst_35 = arith.constant 0.08203125 : f32
    %100 = vector.broadcast %cst_35 : f32 to vector<8x8xf32>
    %101 = arith.addf %99, %100 : vector<8x8xf32>
    %102 = arith.mulf %101, %78 : vector<8x8xf32>
    %cst_36 = arith.constant 0.00267028809 : f32
    %103 = vector.broadcast %cst_36 : f32 to vector<8x8xf32>
    %104 = arith.addf %102, %103 : vector<8x8xf32>
    %105 = arith.mulf %104, %78 : vector<8x8xf32>
    %cst_37 = arith.constant 4.38094139E-5 : f32
    %106 = vector.broadcast %cst_37 : f32 to vector<8x8xf32>
    %107 = arith.addf %105, %106 : vector<8x8xf32>
    %108 = arith.mulf %107, %78 : vector<8x8xf32>
    %cst_38 = arith.constant 3.78116965E-7 : f32
    %109 = vector.broadcast %cst_38 : f32 to vector<8x8xf32>
    %110 = arith.addf %108, %109 : vector<8x8xf32>
    %111 = arith.mulf %110, %78 : vector<8x8xf32>
    %cst_39 = arith.constant 1.60434865E-9 : f32
    %112 = vector.broadcast %cst_39 : f32 to vector<8x8xf32>
    %113 = arith.addf %111, %112 : vector<8x8xf32>
    %114 = arith.mulf %113, %78 : vector<8x8xf32>
    %cst_40 = arith.constant 2.55795385E-12 : f32
    %115 = vector.broadcast %cst_40 : f32 to vector<8x8xf32>
    %116 = arith.addf %114, %115 : vector<8x8xf32>
    %117 = arith.mulf %116, %78 : vector<8x8xf32>
    %cst_41 = arith.constant 0.000000e+00 : f32
    %118 = vector.broadcast %cst_41 : f32 to vector<8x8xf32>
    %119 = arith.addf %117, %118 : vector<8x8xf32>
    %120 = arith.divf %97, %119 : vector<8x8xf32>
    %cst_42 = arith.constant 5.500000e+00 : f32
    %121 = vector.broadcast %cst_42 : f32 to vector<8x8xf32>
    %122 = arith.addf %76, %121 : vector<8x8xf32>
    %cst_43 = arith.constant 5.000000e-01 : f32
    %123 = vector.broadcast %cst_43 : f32 to vector<8x8xf32>
    %124 = arith.addf %76, %123 : vector<8x8xf32>
    %125 = math.log %122 : vector<8x8xf32>
    %126 = arith.mulf %124, %125 : vector<8x8xf32>
    %127 = arith.subf %126, %122 : vector<8x8xf32>
    %cst_44 = arith.constant 0.0097915167 : f32
    %128 = vector.broadcast %cst_44 : f32 to vector<8x8xf32>
    %129 = arith.mulf %128, %120 : vector<8x8xf32>
    %130 = math.log %129 : vector<8x8xf32>
    %131 = arith.addf %127, %130 : vector<8x8xf32>
    %132 = arith.addf %75, %131 : vector<8x8xf32>
    %c0_45 = arith.constant 0 : index
    %c0_46 = arith.constant 0 : index
    %133 = vector.load %arg3[%c0_45, %c0_46] : memref<8x8xf32, #tpu.memory_space<vmem>>, vector<8x8xf32>
    tpu.vector_store %arg3[%c0_45, %c0_46], %132 {strides = array<i32>} : memref<8x8xf32, #tpu.memory_space<vmem>>, vector<8x8xf32>,
    return
  }
  func.func @transform_0(%arg0: i32) -> (i32, i32) {
    %c0_i32 = arith.constant 0 : i32
    %c0_i32_0 = arith.constant 0 : i32
    return %arg0, %c0_i32 : i32, i32
  }
  func.func @transform_1(%arg0: i32) -> (i32, i32) {
    %c0_i32 = arith.constant 0 : i32
    %c0_i32_0 = arith.constant 0 : i32
    return %arg0, %c0_i32 : i32, i32
  }
  func.func @transform_2(%arg0: i32) -> (i32, i32) {
    %c0_i32 = arith.constant 0 : i32
    %c0_i32_0 = arith.constant 0 : i32
    return %arg0, %c0_i32 : i32, i32
  }
}

</mosaic_0001>

<llo_original>
// kernel: tpu_custom_call.1
$region0: #{tpu_custom_call.1}
  #allocation0 [shape = 'u32[]', space=smem, size = 0x4, offset = 0x4, fixed_abs, tag = 'smem constant byte address 0x4 - core index']
  #allocation1 [shape = 'u32[72,128]{1,0:T(1,128)}', space=vmem, size = 0x9000, scoped, tag = 'internal scratch']
  %s0 = inlined_call_operand.hbm [shape: f32[1,128], index: 0, kind: input, shape index: {}]
  %s1 = inlined_call_operand.hbm [shape: f32[1,128], index: 1, kind: input, shape index: {}]
  %s2 = inlined_call_operand.hbm [shape: f32[1,8], index: 2, kind: output, shape index: {}]
  %s3 = sld [smem:[#allocation0]]
  $region26: #{tpu_custom_call.1} parent=0
    _
  %s5 = ssub.s32 1, %s3
  %s6 = scalar_select 0, %s5, %s3
  $region1: #{tpu_custom_call.1} parent=0
    #allocation2 [shape = 'u8[4096]{0}', space=vmem, size = 0x1000, scoped, tag = 'input window, operand 0, single buffered']
    #allocation3 [shape = 's32[1]{0}', space=sflag, size = 0x4, scoped, tag = 'scoped memory for tpu_custom_call.1']
    #allocation4 [shape = 's32[1]{0}', space=sflag, size = 0x4, scoped, tag = 'scoped memory for tpu_custom_call.1']
    #allocation5 [shape = 'u8[4096]{0}', space=vmem, size = 0x1000, scoped, tag = 'input window, operand 1, single buffered']
    #allocation6 [shape = 's32[1]{0}', space=sflag, size = 0x4, scoped, tag = 'scoped memory for tpu_custom_call.1']
    #allocation7 [shape = 'u8[4096]{0}', space=vmem, size = 0x1000, scoped, tag = 'output window, operand 0, single buffered']
    %7 = vsyncpa [#allocation3], 0
    %8 = vsyncpa [#allocation6], 0
    %9 = vsyncpa [#allocation4], 0
    // Predicated region
    $region2: #{tpu_custom_call.1} parent=1 // pred_check
      _
    $region3: #{tpu_custom_call.1} parent=1 // pred_check_branch
      %11 = sbr.rel (0) target = $region5
    $region4: #{tpu_custom_call.1} parent=1 // pred_region
      %13 = vsyncadd [#allocation3], 112
      %s14 = sshll.u32 %s0, 4
      %s15 = int_to_ptr.hbm [resolvable:$true] %s14
      %s16 = sshll.u32 [#allocation2], 4
      %s17 = int_to_ptr.vmem [resolvable:$true] %s16
      %22 = dma.hbm_to_vmem [thread:$0]  %s15, 16, %s17, [#allocation3], 16, 16, 1
    $region5: #{tpu_custom_call.1} parent=1 // pred_fallthru
      _
    // Predicated region
    $region6: #{tpu_custom_call.1} parent=1 // pred_check
      _
    $region7: #{tpu_custom_call.1} parent=1 // pred_check_branch
      %24 = sbr.rel (0) target = $region9
    $region8: #{tpu_custom_call.1} parent=1 // pred_region
      %26 = vsyncadd [#allocation6], 112
      %s27 = sshll.u32 %s1, 4
      %s28 = int_to_ptr.hbm [resolvable:$true] %s27
      %s29 = sshll.u32 [#allocation5], 4
      %s30 = int_to_ptr.vmem [resolvable:$true] %s29
      %35 = dma.hbm_to_vmem [thread:$0]  %s28, 16, %s30, [#allocation6], 16, 16, 1
    $region9: #{tpu_custom_call.1} parent=1 // pred_fallthru
      _
    // Predicated region
    $region10: #{tpu_custom_call.1} parent=1 // pred_check
      _
    $region11: #{tpu_custom_call.1} parent=1 // pred_check_branch
      %37 = sbr.rel (0) target = $region13
    $region12: #{tpu_custom_call.1} parent=1 // pred_region
      %39 = dma.done [#allocation3], 128
    $region13: #{tpu_custom_call.1} parent=1 // pred_fallthru
      _
    // Predicated region
    $region14: #{tpu_custom_call.1} parent=1 // pred_check
      _
    $region15: #{tpu_custom_call.1} parent=1 // pred_check_branch
      %41 = sbr.rel (0) target = $region17
    $region16: #{tpu_custom_call.1} parent=1 // pred_region
      %43 = dma.done [#allocation6], 128
    $region17: #{tpu_custom_call.1} parent=1 // pred_fallthru
      _
    %v44 = vld [vmem:[#allocation2] sm:$0xff]
    %v45 = vld [vmem:[#allocation5] sm:$0xff]
    %v46 = vsub.f32 %v44, 1.0
    %v47 = vlog2.pop %v45
    %v48 = vmul.f32 %v47, 0.6931472
    %v49 = vmul.f32 %v46, %v48
    %v50 = vmul.f32 %v44, 0.00390625
    %v51 = vadd.f32 %v50, 0.13069661
    %v52 = vmul.f32 %v51, %v50
    %v53 = vadd.f32 %v52, 0.007115695
    %v54 = vmul.f32 %v53, %v50
    %v55 = vadd.f32 %v54, 0.00020657238
    %v56 = vmul.f32 %v55, %v50
    %v57 = vadd.f32 %v56, 3.3725319e-06
    %v58 = vmul.f32 %v57, %v50
    %v59 = vadd.f32 %v58, 2.9359457e-08
    %v60 = vmul.f32 %v59, %v50
    %v61 = vadd.f32 %v60, 1.06473386e-10
    %v62 = vadd.f32 %v50, 0.08203125
    %v63 = vmul.f32 %v62, %v50
    %v64 = vadd.f32 %v63, 0.002670288
    %v65 = vmul.f32 %v64, %v50
    %v66 = vadd.f32 %v65, 4.3809414e-05
    %v67 = vmul.f32 %v66, %v50
    %v68 = vadd.f32 %v67, 3.7811697e-07
    %v69 = vmul.f32 %v68, %v50
    %v70 = vadd.f32 %v69, 1.6043487e-09
    %v71 = vmul.f32 %v70, %v50
    %v72 = vadd.f32 %v71, 2.5579538e-12
    %v73 = vmul.f32 %v72, %v50
    %v74 = vadd.f32 %v73, 0.0
    %v75 = vrcp.pop %v74
    %v76 = vmul.f32 %v74, %v75
    %v77 = vsub.f32 1.0, %v76
    %v78 = vmul.f32 %v75, %v77
    %v79 = vadd.f32 %v75, %v78
    %vm80 = vweird.f32 %v74
    %vm81 = vweird.f32 %v75
    %vm82 = vmor %vm80, %vm81
    %v83 = vsel %vm82, %v75, %v79
    %v84 = vand.u32 2147483647, %v74
    %vm85 = vcmp.eq.f32.partialorder %v84, 8.507059e+37
    %v86 = vand.u32 %v74, 2147483648
    %v87 = vor.u32 1.1754944e-38, %v86
    %v88 = vsel %vm85, %v87, %v83
    %v89 = vmul.f32 %v61, %v88
    %v90 = vadd.f32 %v44, 5.5
    %v91 = vadd.f32 %v44, 0.5
    %v92 = vlog2.pop %v90
    %v93 = vmul.f32 %v92, 0.6931472
    %v94 = vmul.f32 %v91, %v93
    %v95 = vsub.f32 %v94, %v90
    %v96 = vmul.f32 %v89, 0.009791517
    %v97 = vlog2.pop %v96
    %v98 = vmul.f32 %v97, 0.6931472
    %v99 = vadd.f32 %v95, %v98
    %v100 = vsub.f32 %v49, %v99
    %v101 = vlaneseq
    %v102 = vshrl.u32 %v101, 7
    %v103 = vadd.s32 %v102, 8
    %v104 = vadd.s32 %v102, 16
    %v105 = vadd.s32 %v102, 24
    %v106 = vadd.s32 %v102, 32
    %v107 = vadd.s32 %v102, 40
    %v108 = vadd.s32 %v102, 48
    %v109 = vadd.s32 %v102, 56
    %v110 = vadd.s32 %v102, 64
    %v111 = vadd.s32 %v102, 72
    %v112 = vadd.s32 %v102, 80
    %v113 = vadd.s32 %v102, 88
    %v114 = vadd.s32 %v102, 96
    %v115 = vadd.s32 %v102, 104
    %v116 = vadd.s32 %v102, 112
    %v117 = vadd.s32 %v102, 120
    %v118 = vlaneseq
    %v119 = vand.u32 %v118, 127
    %v120 = vmul.u32 %v119, 16
    %vm121 = vcmp.ge.s32.totalorder %v102, %v120
    %vm122 = vcmp.ge.s32.totalorder %v103, %v120
    %vm123 = vcmp.ge.s32.totalorder %v104, %v120
    %vm124 = vcmp.ge.s32.totalorder %v105, %v120
    %vm125 = vcmp.ge.s32.totalorder %v106, %v120
    %vm126 = vcmp.ge.s32.totalorder %v107, %v120
    %vm127 = vcmp.ge.s32.totalorder %v108, %v120
    %vm128 = vcmp.ge.s32.totalorder %v109, %v120
    %vm129 = vcmp.ge.s32.totalorder %v110, %v120
    %vm130 = vcmp.ge.s32.totalorder %v111, %v120
    %vm131 = vcmp.ge.s32.totalorder %v112, %v120
    %vm132 = vcmp.ge.s32.totalorder %v113, %v120
    %vm133 = vcmp.ge.s32.totalorder %v114, %v120
    %vm134 = vcmp.ge.s32.totalorder %v115, %v120
    %vm135 = vcmp.ge.s32.totalorder %v116, %v120
    %vm136 = vcmp.ge.s32.totalorder %v117, %v120
    %v137 = vadd.s32 %v120, 16
    %vm138 = vcmp.lt.s32.totalorder %v102, %v137
    %vm139 = vcmp.lt.s32.totalorder %v103, %v137
    %vm140 = vcmp.lt.s32.totalorder %v104, %v137
    %vm141 = vcmp.lt.s32.totalorder %v105, %v137
    %vm142 = vcmp.lt.s32.totalorder %v106, %v137
    %vm143 = vcmp.lt.s32.totalorder %v107, %v137
    %vm144 = vcmp.lt.s32.totalorder %v108, %v137
    %vm145 = vcmp.lt.s32.totalorder %v109, %v137
    %vm146 = vcmp.lt.s32.totalorder %v110, %v137
    %vm147 = vcmp.lt.s32.totalorder %v111, %v137
    %vm148 = vcmp.lt.s32.totalorder %v112, %v137
    %vm149 = vcmp.lt.s32.totalorder %v113, %v137
    %vm150 = vcmp.lt.s32.totalorder %v114, %v137
    %vm151 = vcmp.lt.s32.totalorder %v115, %v137
    %vm152 = vcmp.lt.s32.totalorder %v116, %v137
    %vm153 = vcmp.lt.s32.totalorder %v117, %v137
    %vm154 = vmand %vm121, %vm138
    %vm155 = vmand %vm122, %vm139
    %vm156 = vmand %vm123, %vm140
    %vm157 = vmand %vm124, %vm141
    %vm158 = vmand %vm125, %vm142
    %vm159 = vmand %vm126, %vm143
    %vm160 = vmand %vm127, %vm144
    %vm161 = vmand %vm128, %vm145
    %vm162 = vmand %vm129, %vm146
    %vm163 = vmand %vm130, %vm147
    %vm164 = vmand %vm131, %vm148
    %vm165 = vmand %vm132, %vm149
    %vm166 = vmand %vm133, %vm150
    %vm167 = vmand %vm134, %vm151
    %vm168 = vmand %vm135, %vm152
    %vm169 = vmand %vm136, %vm153
    %v170 = vsel %vm154, 1, 0
    %v171 = vsel %vm155, 1, 0
    %v172 = vsel %vm156, 1, 0
    %v173 = vsel %vm157, 1, 0
    %v174 = vsel %vm158, 1, 0
    %v175 = vsel %vm159, 1, 0
    %v176 = vsel %vm160, 1, 0
    %v177 = vsel %vm161, 1, 0
    %v178 = vsel %vm162, 1, 0
    %v179 = vsel %vm163, 1, 0
    %v180 = vsel %vm164, 1, 0
    %v181 = vsel %vm165, 1, 0
    %v182 = vsel %vm166, 1, 0
    %v183 = vsel %vm167, 1, 0
    %v184 = vsel %vm168, 1, 0
    %v185 = vsel %vm169, 1, 0
    %v186 = vcvt.s32.f32 %v170
    %v187 = vcvt.s32.f32 %v171
    %v188 = vcvt.s32.f32 %v172
    %v189 = vcvt.s32.f32 %v173
    %v190 = vcvt.s32.f32 %v174
    %v191 = vcvt.s32.f32 %v175
    %v192 = vcvt.s32.f32 %v176
    %v193 = vcvt.s32.f32 %v177
    %v194 = vcvt.s32.f32 %v178
    %v195 = vcvt.s32.f32 %v179
    %v196 = vcvt.s32.f32 %v180
    %v197 = vcvt.s32.f32 %v181
    %v198 = vcvt.s32.f32 %v182
    %v199 = vcvt.s32.f32 %v183
    %v200 = vcvt.s32.f32 %v184
    %v201 = vcvt.s32.f32 %v185
    %v202 = vand.u32 %v201, 4294901760
    %203 = vmatpush.msra.mxu0 %v202
    %v204 = vand.u32 %v200, 4294901760
    %205 = vmatpush.msra.mxu0 %v204
    %v206 = vand.u32 %v199, 4294901760
    %207 = vmatpush.msra.mxu0 %v206
    %v208 = vand.u32 %v198, 4294901760
    %209 = vmatpush.msra.mxu0 %v208
    %v210 = vand.u32 %v197, 4294901760
    %211 = vmatpush.msra.mxu0 %v210
    %v212 = vand.u32 %v196, 4294901760
    %213 = vmatpush.msra.mxu0 %v212
    %v214 = vand.u32 %v195, 4294901760
    %215 = vmatpush.msra.mxu0 %v214
    %v216 = vand.u32 %v194, 4294901760
    %217 = vmatpush.msra.mxu0 %v216
    %v218 = vand.u32 %v193, 4294901760
    %219 = vmatpush.msra.mxu0 %v218
    %v220 = vand.u32 %v192, 4294901760
    %221 = vmatpush.msra.mxu0 %v220
    %v222 = vand.u32 %v191, 4294901760
    %223 = vmatpush.msra.mxu0 %v222
    %v224 = vand.u32 %v190, 4294901760
    %225 = vmatpush.msra.mxu0 %v224
    %v226 = vand.u32 %v189, 4294901760
    %227 = vmatpush.msra.mxu0 %v226
    %v228 = vand.u32 %v188, 4294901760
    %229 = vmatpush.msra.mxu0 %v228
    %v230 = vand.u32 %v187, 4294901760
    %231 = vmatpush.msra.mxu0 %v230
    %v232 = vand.u32 %v186, 4294901760
    %233 = vmatpush.msra.mxu0 %v232
    %v234 = vand.u32 %v44, 4294901760
    %v235 = vsub.f32 %v44, %v234
    %v236 = vand.u32 %v235, 4294901760
    %v237 = vsub.f32 %v235, %v236
    %v238 = vand.u32 %v237, 4294901760
    %239 = vmatmul.f32.gmra.mxu0 %v238
    %v240 = vpop.f32.mrf.mxu0
    %v241 = vadd.f32 0.0, %v240
    %242 = vdwg.mxu0
    %v243 = vand.u32 %v201, 4294901760
    %v244 = vsub.f32 %v201, %v243
    %v245 = vand.u32 %v244, 4294901760
    %v246 = vsub.f32 %v244, %v245
    %v247 = vand.u32 %v246, 4294901760
    %248 = vmatpush.msra.mxu0 %v247
    %v249 = vand.u32 %v200, 4294901760
    %v250 = vsub.f32 %v200, %v249
    %v251 = vand.u32 %v250, 4294901760
    %v252 = vsub.f32 %v250, %v251
    %v253 = vand.u32 %v252, 4294901760
    %254 = vmatpush.msra.mxu0 %v253
    %v255 = vand.u32 %v199, 4294901760
    %v256 = vsub.f32 %v199, %v255
    %v257 = vand.u32 %v256, 4294901760
    %v258 = vsub.f32 %v256, %v257
    %v259 = vand.u32 %v258, 4294901760
    %260 = vmatpush.msra.mxu0 %v259
    %v261 = vand.u32 %v198, 4294901760
    %v262 = vsub.f32 %v198, %v261
    %v263 = vand.u32 %v262, 4294901760
    %v264 = vsub.f32 %v262, %v263
    %v265 = vand.u32 %v264, 4294901760
    %266 = vmatpush.msra.mxu0 %v265
    %v267 = vand.u32 %v197, 4294901760
    %v268 = vsub.f32 %v197, %v267
    %v269 = vand.u32 %v268, 4294901760
    %v270 = vsub.f32 %v268, %v269
    %v271 = vand.u32 %v270, 4294901760
    %272 = vmatpush.msra.mxu0 %v271
    %v273 = vand.u32 %v196, 4294901760
    %v274 = vsub.f32 %v196, %v273
    %v275 = vand.u32 %v274, 4294901760
    %v276 = vsub.f32 %v274, %v275
    %v277 = vand.u32 %v276, 4294901760
    %278 = vmatpush.msra.mxu0 %v277
    %v279 = vand.u32 %v195, 4294901760
    %v280 = vsub.f32 %v195, %v279
    %v281 = vand.u32 %v280, 4294901760
    %v282 = vsub.f32 %v280, %v281
    %v283 = vand.u32 %v282, 4294901760
    %284 = vmatpush.msra.mxu0 %v283
    %v285 = vand.u32 %v194, 4294901760
    %v286 = vsub.f32 %v194, %v285
    %v287 = vand.u32 %v286, 4294901760
    %v288 = vsub.f32 %v286, %v287
    %v289 = vand.u32 %v288, 4294901760
    %290 = vmatpush.msra.mxu0 %v289
    %v291 = vand.u32 %v193, 4294901760
    %v292 = vsub.f32 %v193, %v291
    %v293 = vand.u32 %v292, 4294901760
    %v294 = vsub.f32 %v292, %v293
    %v295 = vand.u32 %v294, 4294901760
    %296 = vmatpush.msra.mxu0 %v295
    %v297 = vand.u32 %v192, 4294901760
    %v298 = vsub.f32 %v192, %v297
    %v299 = vand.u32 %v298, 4294901760
    %v300 = vsub.f32 %v298, %v299
    %v301 = vand.u32 %v300, 4294901760
    %302 = vmatpush.msra.mxu0 %v301
    %v303 = vand.u32 %v191, 4294901760
    %v304 = vsub.f32 %v191, %v303
    %v305 = vand.u32 %v304, 4294901760
    %v306 = vsub.f32 %v304, %v305
    %v307 = vand.u32 %v306, 4294901760
    %308 = vmatpush.msra.mxu0 %v307
    %v309 = vand.u32 %v190, 4294901760
    %v310 = vsub.f32 %v190, %v309
    %v311 = vand.u32 %v310, 4294901760
    %v312 = vsub.f32 %v310, %v311
    %v313 = vand.u32 %v312, 4294901760
    %314 = vmatpush.msra.mxu0 %v313
    %v315 = vand.u32 %v189, 4294901760
    %v316 = vsub.f32 %v189, %v315
    %v317 = vand.u32 %v316, 4294901760
    %v318 = vsub.f32 %v316, %v317
    %v319 = vand.u32 %v318, 4294901760
    %320 = vmatpush.msra.mxu0 %v319
    %v321 = vand.u32 %v188, 4294901760
    %v322 = vsub.f32 %v188, %v321
    %v323 = vand.u32 %v322, 4294901760
    %v324 = vsub.f32 %v322, %v323
    %v325 = vand.u32 %v324, 4294901760
    %326 = vmatpush.msra.mxu0 %v325
    %v327 = vand.u32 %v187, 4294901760
    %v328 = vsub.f32 %v187, %v327
    %v329 = vand.u32 %v328, 4294901760
    %v330 = vsub.f32 %v328, %v329
    %v331 = vand.u32 %v330, 4294901760
    %332 = vmatpush.msra.mxu0 %v331
    %v333 = vand.u32 %v186, 4294901760
    %v334 = vsub.f32 %v186, %v333
    %v335 = vand.u32 %v334, 4294901760
    %v336 = vsub.f32 %v334, %v335
    %v337 = vand.u32 %v336, 4294901760
    %338 = vmatpush.msra.mxu0 %v337
    %v339 = vand.u32 %v44, 4294901760
    %340 = vmatmul.f32.gmra.mxu0 %v339
    %v341 = vpop.f32.mrf.mxu0
    %v342 = vadd.f32 %v241, %v341
    %343 = vdwg.mxu0
    %v344 = vand.u32 %v201, 4294901760
    %v345 = vsub.f32 %v201, %v344
    %346 = vmatpush.msra.mxu0 %v345
    %v347 = vand.u32 %v200, 4294901760
    %v348 = vsub.f32 %v200, %v347
    %349 = vmatpush.msra.mxu0 %v348
    %v350 = vand.u32 %v199, 4294901760
    %v351 = vsub.f32 %v199, %v350
    %352 = vmatpush.msra.mxu0 %v351
    %v353 = vand.u32 %v198, 4294901760
    %v354 = vsub.f32 %v198, %v353
    %355 = vmatpush.msra.mxu0 %v354
    %v356 = vand.u32 %v197, 4294901760
    %v357 = vsub.f32 %v197, %v356
    %358 = vmatpush.msra.mxu0 %v357
    %v359 = vand.u32 %v196, 4294901760
    %v360 = vsub.f32 %v196, %v359
    %361 = vmatpush.msra.mxu0 %v360
    %v362 = vand.u32 %v195, 4294901760
    %v363 = vsub.f32 %v195, %v362
    %364 = vmatpush.msra.mxu0 %v363
    %v365 = vand.u32 %v194, 4294901760
    %v366 = vsub.f32 %v194, %v365
    %367 = vmatpush.msra.mxu0 %v366
    %v368 = vand.u32 %v193, 4294901760
    %v369 = vsub.f32 %v193, %v368
    %370 = vmatpush.msra.mxu0 %v369
    %v371 = vand.u32 %v192, 4294901760
    %v372 = vsub.f32 %v192, %v371
    %373 = vmatpush.msra.mxu0 %v372
    %v374 = vand.u32 %v191, 4294901760
    %v375 = vsub.f32 %v191, %v374
    %376 = vmatpush.msra.mxu0 %v375
    %v377 = vand.u32 %v190, 4294901760
    %v378 = vsub.f32 %v190, %v377
    %379 = vmatpush.msra.mxu0 %v378
    %v380 = vand.u32 %v189, 4294901760
    %v381 = vsub.f32 %v189, %v380
    %382 = vmatpush.msra.mxu0 %v381
    %v383 = vand.u32 %v188, 4294901760
    %v384 = vsub.f32 %v188, %v383
    %385 = vmatpush.msra.mxu0 %v384
    %v386 = vand.u32 %v187, 4294901760
    %v387 = vsub.f32 %v187, %v386
    %388 = vmatpush.msra.mxu0 %v387
    %v389 = vand.u32 %v186, 4294901760
    %v390 = vsub.f32 %v186, %v389
    %391 = vmatpush.msra.mxu0 %v390
    %v392 = vand.u32 %v44, 4294901760
    %v393 = vsub.f32 %v44, %v392
    %394 = vmatmul.f32.gmra.mxu0 %v393
    %v395 = vpop.f32.mrf.mxu0
    %v396 = vadd.f32 %v342, %v395
    %397 = vdwg.mxu0
    %v398 = vand.u32 %v201, 4294901760
    %399 = vmatpush.msra.mxu0 %v398
    %v400 = vand.u32 %v200, 4294901760
    %401 = vmatpush.msra.mxu0 %v400
    %v402 = vand.u32 %v199, 4294901760
    %403 = vmatpush.msra.mxu0 %v402
    %v404 = vand.u32 %v198, 4294901760
    %405 = vmatpush.msra.mxu0 %v404
    %v406 = vand.u32 %v197, 4294901760
    %407 = vmatpush.msra.mxu0 %v406
    %v408 = vand.u32 %v196, 4294901760
    %409 = vmatpush.msra.mxu0 %v408
    %v410 = vand.u32 %v195, 4294901760
    %411 = vmatpush.msra.mxu0 %v410
    %v412 = vand.u32 %v194, 4294901760
    %413 = vmatpush.msra.mxu0 %v412
    %v414 = vand.u32 %v193, 4294901760
    %415 = vmatpush.msra.mxu0 %v414
    %v416 = vand.u32 %v192, 4294901760
    %417 = vmatpush.msra.mxu0 %v416
    %v418 = vand.u32 %v191, 4294901760
    %419 = vmatpush.msra.mxu0 %v418
    %v420 = vand.u32 %v190, 4294901760
    %421 = vmatpush.msra.mxu0 %v420
    %v422 = vand.u32 %v189, 4294901760
    %423 = vmatpush.msra.mxu0 %v422
    %v424 = vand.u32 %v188, 4294901760
    %425 = vmatpush.msra.mxu0 %v424
    %v426 = vand.u32 %v187, 4294901760
    %427 = vmatpush.msra.mxu0 %v426
    %v428 = vand.u32 %v186, 4294901760
    %429 = vmatpush.msra.mxu0 %v428
    %v430 = vand.u32 %v44, 4294901760
    %v431 = vsub.f32 %v44, %v430
    %v432 = vand.u32 %v431, 4294901760
    %433 = vmatmul.f32.gmra.mxu0 %v432
    %v434 = vpop.f32.mrf.mxu0
    %v435 = vadd.f32 %v396, %v434
    %436 = vdwg.mxu0
    %v437 = vand.u32 %v201, 4294901760
    %v438 = vsub.f32 %v201, %v437
    %v439 = vand.u32 %v438, 4294901760
    %440 = vmatpush.msra.mxu0 %v439
    %v441 = vand.u32 %v200, 4294901760
    %v442 = vsub.f32 %v200, %v441
    %v443 = vand.u32 %v442, 4294901760
    %444 = vmatpush.msra.mxu0 %v443
    %v445 = vand.u32 %v199, 4294901760
    %v446 = vsub.f32 %v199, %v445
    %v447 = vand.u32 %v446, 4294901760
    %448 = vmatpush.msra.mxu0 %v447
    %v449 = vand.u32 %v198, 4294901760
    %v450 = vsub.f32 %v198, %v449
    %v451 = vand.u32 %v450, 4294901760
    %452 = vmatpush.msra.mxu0 %v451
    %v453 = vand.u32 %v197, 4294901760
    %v454 = vsub.f32 %v197, %v453
    %v455 = vand.u32 %v454, 4294901760
    %456 = vmatpush.msra.mxu0 %v455
    %v457 = vand.u32 %v196, 4294901760
    %v458 = vsub.f32 %v196, %v457
    %v459 = vand.u32 %v458, 4294901760
    %460 = vmatpush.msra.mxu0 %v459
    %v461 = vand.u32 %v195, 4294901760
    %v462 = vsub.f32 %v195, %v461
    %v463 = vand.u32 %v462, 4294901760
    %464 = vmatpush.msra.mxu0 %v463
    %v465 = vand.u32 %v194, 4294901760
    %v466 = vsub.f32 %v194, %v465
    %v467 = vand.u32 %v466, 4294901760
    %468 = vmatpush.msra.mxu0 %v467
    %v469 = vand.u32 %v193, 4294901760
    %v470 = vsub.f32 %v193, %v469
    %v471 = vand.u32 %v470, 4294901760
    %472 = vmatpush.msra.mxu0 %v471
    %v473 = vand.u32 %v192, 4294901760
    %v474 = vsub.f32 %v192, %v473
    %v475 = vand.u32 %v474, 4294901760
    %476 = vmatpush.msra.mxu0 %v475
    %v477 = vand.u32 %v191, 4294901760
    %v478 = vsub.f32 %v191, %v477
    %v479 = vand.u32 %v478, 4294901760
    %480 = vmatpush.msra.mxu0 %v479
    %v481 = vand.u32 %v190, 4294901760
    %v482 = vsub.f32 %v190, %v481
    %v483 = vand.u32 %v482, 4294901760
    %484 = vmatpush.msra.mxu0 %v483
    %v485 = vand.u32 %v189, 4294901760
    %v486 = vsub.f32 %v189, %v485
    %v487 = vand.u32 %v486, 4294901760
    %488 = vmatpush.msra.mxu0 %v487
    %v489 = vand.u32 %v188, 4294901760
    %v490 = vsub.f32 %v188, %v489
    %v491 = vand.u32 %v490, 4294901760
    %492 = vmatpush.msra.mxu0 %v491
    %v493 = vand.u32 %v187, 4294901760
    %v494 = vsub.f32 %v187, %v493
    %v495 = vand.u32 %v494, 4294901760
    %496 = vmatpush.msra.mxu0 %v495
    %v497 = vand.u32 %v186, 4294901760
    %v498 = vsub.f32 %v186, %v497
    %v499 = vand.u32 %v498, 4294901760
    %500 = vmatpush.msra.mxu0 %v499
    %v501 = vand.u32 %v44, 4294901760
    %502 = vmatmul.f32.gmra.mxu0 %v501
    %v503 = vpop.f32.mrf.mxu0
    %v504 = vadd.f32 %v435, %v503
    %505 = vdwg.mxu0
    %v506 = vand.u32 %v201, 4294901760
    %507 = vmatpush.msra.mxu0 %v506
    %v508 = vand.u32 %v200, 4294901760
    %509 = vmatpush.msra.mxu0 %v508
    %v510 = vand.u32 %v199, 4294901760
    %511 = vmatpush.msra.mxu0 %v510
    %v512 = vand.u32 %v198, 4294901760
    %513 = vmatpush.msra.mxu0 %v512
    %v514 = vand.u32 %v197, 4294901760
    %515 = vmatpush.msra.mxu0 %v514
    %v516 = vand.u32 %v196, 4294901760
    %517 = vmatpush.msra.mxu0 %v516
    %v518 = vand.u32 %v195, 4294901760
    %519 = vmatpush.msra.mxu0 %v518
    %v520 = vand.u32 %v194, 4294901760
    %521 = vmatpush.msra.mxu0 %v520
    %v522 = vand.u32 %v193, 4294901760
    %523 = vmatpush.msra.mxu0 %v522
    %v524 = vand.u32 %v192, 4294901760
    %525 = vmatpush.msra.mxu0 %v524
    %v526 = vand.u32 %v191, 4294901760
    %527 = vmatpush.msra.mxu0 %v526
    %v528 = vand.u32 %v190, 4294901760
    %529 = vmatpush.msra.mxu0 %v528
    %v530 = vand.u32 %v189, 4294901760
    %531 = vmatpush.msra.mxu0 %v530
    %v532 = vand.u32 %v188, 4294901760
    %533 = vmatpush.msra.mxu0 %v532
    %v534 = vand.u32 %v187, 4294901760
    %535 = vmatpush.msra.mxu0 %v534
    %v536 = vand.u32 %v186, 4294901760
    %537 = vmatpush.msra.mxu0 %v536
    %v538 = vand.u32 %v44, 4294901760
    %539 = vmatmul.f32.gmra.mxu0 %v538
    %v540 = vpop.f32.mrf.mxu0
    %v541 = vadd.f32 %v504, %v540
    %542 = vdwg.mxu0
    %v543 = vmul.f32 %v541, 0.00390625
    %v544 = vadd.f32 %v543, 0.13069661
    %v545 = vmul.f32 %v544, %v543
    %v546 = vadd.f32 %v545, 0.007115695
    %v547 = vmul.f32 %v546, %v543
    %v548 = vadd.f32 %v547, 0.00020657238
    %v549 = vmul.f32 %v548, %v543
    %v550 = vadd.f32 %v549, 3.3725319e-06
    %v551 = vmul.f32 %v550, %v543
    %v552 = vadd.f32 %v551, 2.9359457e-08
    %v553 = vmul.f32 %v552, %v543
    %v554 = vadd.f32 %v553, 1.06473386e-10
    %v555 = vadd.f32 %v543, 0.08203125
    %v556 = vmul.f32 %v555, %v543
    %v557 = vadd.f32 %v556, 0.002670288
    %v558 = vmul.f32 %v557, %v543
    %v559 = vadd.f32 %v558, 4.3809414e-05
    %v560 = vmul.f32 %v559, %v543
    %v561 = vadd.f32 %v560, 3.7811697e-07
    %v562 = vmul.f32 %v561, %v543
    %v563 = vadd.f32 %v562, 1.6043487e-09
    %v564 = vmul.f32 %v563, %v543
    %v565 = vadd.f32 %v564, 2.5579538e-12
    %v566 = vmul.f32 %v565, %v543
    %v567 = vadd.f32 %v566, 0.0
    %v568 = vrcp.pop %v567
    %v569 = vmul.f32 %v567, %v568
    %v570 = vsub.f32 1.0, %v569
    %v571 = vmul.f32 %v568, %v570
    %v572 = vadd.f32 %v568, %v571
    %vm573 = vweird.f32 %v567
    %vm574 = vweird.f32 %v568
    %vm575 = vmor %vm573, %vm574
    %v576 = vsel %vm575, %v568, %v572
    %v577 = vand.u32 2147483647, %v567
    %vm578 = vcmp.eq.f32.partialorder %v577, 8.507059e+37
    %v579 = vand.u32 %v567, 2147483648
    %v580 = vor.u32 1.1754944e-38, %v579
    %v581 = vsel %vm578, %v580, %v576
    %v582 = vmul.f32 %v554, %v581
    %v583 = vadd.f32 %v541, 5.5
    %v584 = vadd.f32 %v541, 0.5
    %v585 = vlog2.pop %v583
    %v586 = vmul.f32 %v585, 0.6931472
    %v587 = vmul.f32 %v584, %v586
    %v588 = vsub.f32 %v587, %v583
    %v589 = vmul.f32 %v582, 0.009791517
    %v590 = vlog2.pop %v589
    %v591 = vmul.f32 %v590, 0.6931472
    %v592 = vadd.f32 %v588, %v591
    %v593 = vand.u32 %v201, 4294901760
    %594 = vmatpush.msra.mxu0 %v593
    %v595 = vand.u32 %v200, 4294901760
    %596 = vmatpush.msra.mxu0 %v595
    %v597 = vand.u32 %v199, 4294901760
    %598 = vmatpush.msra.mxu0 %v597
    %v599 = vand.u32 %v198, 4294901760
    %600 = vmatpush.msra.mxu0 %v599
    %v601 = vand.u32 %v197, 4294901760
    %602 = vmatpush.msra.mxu0 %v601
    %v603 = vand.u32 %v196, 4294901760
    %604 = vmatpush.msra.mxu0 %v603
    %v605 = vand.u32 %v195, 4294901760
    %606 = vmatpush.msra.mxu0 %v605
    %v607 = vand.u32 %v194, 4294901760
    %608 = vmatpush.msra.mxu0 %v607
    %v609 = vand.u32 %v193, 4294901760
    %610 = vmatpush.msra.mxu0 %v609
    %v611 = vand.u32 %v192, 4294901760
    %612 = vmatpush.msra.mxu0 %v611
    %v613 = vand.u32 %v191, 4294901760
    %614 = vmatpush.msra.mxu0 %v613
    %v615 = vand.u32 %v190, 4294901760
    %616 = vmatpush.msra.mxu0 %v615
    %v617 = vand.u32 %v189, 4294901760
    %618 = vmatpush.msra.mxu0 %v617
    %v619 = vand.u32 %v188, 4294901760
    %620 = vmatpush.msra.mxu0 %v619
    %v621 = vand.u32 %v187, 4294901760
    %622 = vmatpush.msra.mxu0 %v621
    %v623 = vand.u32 %v186, 4294901760
    %624 = vmatpush.msra.mxu0 %v623
    %v625 = vand.u32 %v100, 4294901760
    %v626 = vsub.f32 %v100, %v625
    %v627 = vand.u32 %v626, 4294901760
    %v628 = vsub.f32 %v626, %v627
    %v629 = vand.u32 %v628, 4294901760
    %630 = vmatmul.f32.gmra.mxu0 %v629
    %v631 = vpop.f32.mrf.mxu0
    %v632 = vadd.f32 %v592, %v631
    %633 = vdwg.mxu0
    %v634 = vand.u32 %v201, 4294901760
    %v635 = vsub.f32 %v201, %v634
    %v636 = vand.u32 %v635, 4294901760
    %v637 = vsub.f32 %v635, %v636
    %v638 = vand.u32 %v637, 4294901760
    %639 = vmatpush.msra.mxu0 %v638
    %v640 = vand.u32 %v200, 4294901760
    %v641 = vsub.f32 %v200, %v640
    %v642 = vand.u32 %v641, 4294901760
    %v643 = vsub.f32 %v641, %v642
    %v644 = vand.u32 %v643, 4294901760
    %645 = vmatpush.msra.mxu0 %v644
    %v646 = vand.u32 %v199, 4294901760
    %v647 = vsub.f32 %v199, %v646
    %v648 = vand.u32 %v647, 4294901760
    %v649 = vsub.f32 %v647, %v648
    %v650 = vand.u32 %v649, 4294901760
    %651 = vmatpush.msra.mxu0 %v650
    %v652 = vand.u32 %v198, 4294901760
    %v653 = vsub.f32 %v198, %v652
    %v654 = vand.u32 %v653, 4294901760
    %v655 = vsub.f32 %v653, %v654
    %v656 = vand.u32 %v655, 4294901760
    %657 = vmatpush.msra.mxu0 %v656
    %v658 = vand.u32 %v197, 4294901760
    %v659 = vsub.f32 %v197, %v658
    %v660 = vand.u32 %v659, 4294901760
    %v661 = vsub.f32 %v659, %v660
    %v662 = vand.u32 %v661, 4294901760
    %663 = vmatpush.msra.mxu0 %v662
    %v664 = vand.u32 %v196, 4294901760
    %v665 = vsub.f32 %v196, %v664
    %v666 = vand.u32 %v665, 4294901760
    %v667 = vsub.f32 %v665, %v666
    %v668 = vand.u32 %v667, 4294901760
    %669 = vmatpush.msra.mxu0 %v668
    %v670 = vand.u32 %v195, 4294901760
    %v671 = vsub.f32 %v195, %v670
    %v672 = vand.u32 %v671, 4294901760
    %v673 = vsub.f32 %v671, %v672
    %v674 = vand.u32 %v673, 4294901760
    %675 = vmatpush.msra.mxu0 %v674
    %v676 = vand.u32 %v194, 4294901760
    %v677 = vsub.f32 %v194, %v676
    %v678 = vand.u32 %v677, 4294901760
    %v679 = vsub.f32 %v677, %v678
    %v680 = vand.u32 %v679, 4294901760
    %681 = vmatpush.msra.mxu0 %v680
    %v682 = vand.u32 %v193, 4294901760
    %v683 = vsub.f32 %v193, %v682
    %v684 = vand.u32 %v683, 4294901760
    %v685 = vsub.f32 %v683, %v684
    %v686 = vand.u32 %v685, 4294901760
    %687 = vmatpush.msra.mxu0 %v686
    %v688 = vand.u32 %v192, 4294901760
    %v689 = vsub.f32 %v192, %v688
    %v690 = vand.u32 %v689, 4294901760
    %v691 = vsub.f32 %v689, %v690
    %v692 = vand.u32 %v691, 4294901760
    %693 = vmatpush.msra.mxu0 %v692
    %v694 = vand.u32 %v191, 4294901760
    %v695 = vsub.f32 %v191, %v694
    %v696 = vand.u32 %v695, 4294901760
    %v697 = vsub.f32 %v695, %v696
    %v698 = vand.u32 %v697, 4294901760
    %699 = vmatpush.msra.mxu0 %v698
    %v700 = vand.u32 %v190, 4294901760
    %v701 = vsub.f32 %v190, %v700
    %v702 = vand.u32 %v701, 4294901760
    %v703 = vsub.f32 %v701, %v702
    %v704 = vand.u32 %v703, 4294901760
    %705 = vmatpush.msra.mxu0 %v704
    %v706 = vand.u32 %v189, 4294901760
    %v707 = vsub.f32 %v189, %v706
    %v708 = vand.u32 %v707, 4294901760
    %v709 = vsub.f32 %v707, %v708
    %v710 = vand.u32 %v709, 4294901760
    %711 = vmatpush.msra.mxu0 %v710
    %v712 = vand.u32 %v188, 4294901760
    %v713 = vsub.f32 %v188, %v712
    %v714 = vand.u32 %v713, 4294901760
    %v715 = vsub.f32 %v713, %v714
    %v716 = vand.u32 %v715, 4294901760
    %717 = vmatpush.msra.mxu0 %v716
    %v718 = vand.u32 %v187, 4294901760
    %v719 = vsub.f32 %v187, %v718
    %v720 = vand.u32 %v719, 4294901760
    %v721 = vsub.f32 %v719, %v720
    %v722 = vand.u32 %v721, 4294901760
    %723 = vmatpush.msra.mxu0 %v722
    %v724 = vand.u32 %v186, 4294901760
    %v725 = vsub.f32 %v186, %v724
    %v726 = vand.u32 %v725, 4294901760
    %v727 = vsub.f32 %v725, %v726
    %v728 = vand.u32 %v727, 4294901760
    %729 = vmatpush.msra.mxu0 %v728
    %v730 = vand.u32 %v100, 4294901760
    %731 = vmatmul.f32.gmra.mxu0 %v730
    %v732 = vpop.f32.mrf.mxu0
    %v733 = vadd.f32 %v632, %v732
    %734 = vdwg.mxu0
    %v735 = vand.u32 %v201, 4294901760
    %v736 = vsub.f32 %v201, %v735
    %737 = vmatpush.msra.mxu0 %v736
    %v738 = vand.u32 %v200, 4294901760
    %v739 = vsub.f32 %v200, %v738
    %740 = vmatpush.msra.mxu0 %v739
    %v741 = vand.u32 %v199, 4294901760
    %v742 = vsub.f32 %v199, %v741
    %743 = vmatpush.msra.mxu0 %v742
    %v744 = vand.u32 %v198, 4294901760
    %v745 = vsub.f32 %v198, %v744
    %746 = vmatpush.msra.mxu0 %v745
    %v747 = vand.u32 %v197, 4294901760
    %v748 = vsub.f32 %v197, %v747
    %749 = vmatpush.msra.mxu0 %v748
    %v750 = vand.u32 %v196, 4294901760
    %v751 = vsub.f32 %v196, %v750
    %752 = vmatpush.msra.mxu0 %v751
    %v753 = vand.u32 %v195, 4294901760
    %v754 = vsub.f32 %v195, %v753
    %755 = vmatpush.msra.mxu0 %v754
    %v756 = vand.u32 %v194, 4294901760
    %v757 = vsub.f32 %v194, %v756
    %758 = vmatpush.msra.mxu0 %v757
    %v759 = vand.u32 %v193, 4294901760
    %v760 = vsub.f32 %v193, %v759
    %761 = vmatpush.msra.mxu0 %v760
    %v762 = vand.u32 %v192, 4294901760
    %v763 = vsub.f32 %v192, %v762
    %764 = vmatpush.msra.mxu0 %v763
    %v765 = vand.u32 %v191, 4294901760
    %v766 = vsub.f32 %v191, %v765
    %767 = vmatpush.msra.mxu0 %v766
    %v768 = vand.u32 %v190, 4294901760
    %v769 = vsub.f32 %v190, %v768
    %770 = vmatpush.msra.mxu0 %v769
    %v771 = vand.u32 %v189, 4294901760
    %v772 = vsub.f32 %v189, %v771
    %773 = vmatpush.msra.mxu0 %v772
    %v774 = vand.u32 %v188, 4294901760
    %v775 = vsub.f32 %v188, %v774
    %776 = vmatpush.msra.mxu0 %v775
    %v777 = vand.u32 %v187, 4294901760
    %v778 = vsub.f32 %v187, %v777
    %779 = vmatpush.msra.mxu0 %v778
    %v780 = vand.u32 %v186, 4294901760
    %v781 = vsub.f32 %v186, %v780
    %782 = vmatpush.msra.mxu0 %v781
    %v783 = vand.u32 %v100, 4294901760
    %v784 = vsub.f32 %v100, %v783
    %785 = vmatmul.f32.gmra.mxu0 %v784
    %v786 = vpop.f32.mrf.mxu0
    %v787 = vadd.f32 %v733, %v786
    %788 = vdwg.mxu0
    %v789 = vand.u32 %v201, 4294901760
    %790 = vmatpush.msra.mxu0 %v789
    %v791 = vand.u32 %v200, 4294901760
    %792 = vmatpush.msra.mxu0 %v791
    %v793 = vand.u32 %v199, 4294901760
    %794 = vmatpush.msra.mxu0 %v793
    %v795 = vand.u32 %v198, 4294901760
    %796 = vmatpush.msra.mxu0 %v795
    %v797 = vand.u32 %v197, 4294901760
    %798 = vmatpush.msra.mxu0 %v797
    %v799 = vand.u32 %v196, 4294901760
    %800 = vmatpush.msra.mxu0 %v799
    %v801 = vand.u32 %v195, 4294901760
    %802 = vmatpush.msra.mxu0 %v801
    %v803 = vand.u32 %v194, 4294901760
    %804 = vmatpush.msra.mxu0 %v803
    %v805 = vand.u32 %v193, 4294901760
    %806 = vmatpush.msra.mxu0 %v805
    %v807 = vand.u32 %v192, 4294901760
    %808 = vmatpush.msra.mxu0 %v807
    %v809 = vand.u32 %v191, 4294901760
    %810 = vmatpush.msra.mxu0 %v809
    %v811 = vand.u32 %v190, 4294901760
    %812 = vmatpush.msra.mxu0 %v811
    %v813 = vand.u32 %v189, 4294901760
    %814 = vmatpush.msra.mxu0 %v813
    %v815 = vand.u32 %v188, 4294901760
    %816 = vmatpush.msra.mxu0 %v815
    %v817 = vand.u32 %v187, 4294901760
    %818 = vmatpush.msra.mxu0 %v817
    %v819 = vand.u32 %v186, 4294901760
    %820 = vmatpush.msra.mxu0 %v819
    %v821 = vand.u32 %v100, 4294901760
    %v822 = vsub.f32 %v100, %v821
    %v823 = vand.u32 %v822, 4294901760
    %824 = vmatmul.f32.gmra.mxu0 %v823
    %v825 = vpop.f32.mrf.mxu0
    %v826 = vadd.f32 %v787, %v825
    %827 = vdwg.mxu0
    %v828 = vand.u32 %v201, 4294901760
    %v829 = vsub.f32 %v201, %v828
    %v830 = vand.u32 %v829, 4294901760
    %831 = vmatpush.msra.mxu0 %v830
    %v832 = vand.u32 %v200, 4294901760
    %v833 = vsub.f32 %v200, %v832
    %v834 = vand.u32 %v833, 4294901760
    %835 = vmatpush.msra.mxu0 %v834
    %v836 = vand.u32 %v199, 4294901760
    %v837 = vsub.f32 %v199, %v836
    %v838 = vand.u32 %v837, 4294901760
    %839 = vmatpush.msra.mxu0 %v838
    %v840 = vand.u32 %v198, 4294901760
    %v841 = vsub.f32 %v198, %v840
    %v842 = vand.u32 %v841, 4294901760
    %843 = vmatpush.msra.mxu0 %v842
    %v844 = vand.u32 %v197, 4294901760
    %v845 = vsub.f32 %v197, %v844
    %v846 = vand.u32 %v845, 4294901760
    %847 = vmatpush.msra.mxu0 %v846
    %v848 = vand.u32 %v196, 4294901760
    %v849 = vsub.f32 %v196, %v848
    %v850 = vand.u32 %v849, 4294901760
    %851 = vmatpush.msra.mxu0 %v850
    %v852 = vand.u32 %v195, 4294901760
    %v853 = vsub.f32 %v195, %v852
    %v854 = vand.u32 %v853, 4294901760
    %855 = vmatpush.msra.mxu0 %v854
    %v856 = vand.u32 %v194, 4294901760
    %v857 = vsub.f32 %v194, %v856
    %v858 = vand.u32 %v857, 4294901760
    %859 = vmatpush.msra.mxu0 %v858
    %v860 = vand.u32 %v193, 4294901760
    %v861 = vsub.f32 %v193, %v860
    %v862 = vand.u32 %v861, 4294901760
    %863 = vmatpush.msra.mxu0 %v862
    %v864 = vand.u32 %v192, 4294901760
    %v865 = vsub.f32 %v192, %v864
    %v866 = vand.u32 %v865, 4294901760
    %867 = vmatpush.msra.mxu0 %v866
    %v868 = vand.u32 %v191, 4294901760
    %v869 = vsub.f32 %v191, %v868
    %v870 = vand.u32 %v869, 4294901760
    %871 = vmatpush.msra.mxu0 %v870
    %v872 = vand.u32 %v190, 4294901760
    %v873 = vsub.f32 %v190, %v872
    %v874 = vand.u32 %v873, 4294901760
    %875 = vmatpush.msra.mxu0 %v874
    %v876 = vand.u32 %v189, 4294901760
    %v877 = vsub.f32 %v189, %v876
    %v878 = vand.u32 %v877, 4294901760
    %879 = vmatpush.msra.mxu0 %v878
    %v880 = vand.u32 %v188, 4294901760
    %v881 = vsub.f32 %v188, %v880
    %v882 = vand.u32 %v881, 4294901760
    %883 = vmatpush.msra.mxu0 %v882
    %v884 = vand.u32 %v187, 4294901760
    %v885 = vsub.f32 %v187, %v884
    %v886 = vand.u32 %v885, 4294901760
    %887 = vmatpush.msra.mxu0 %v886
    %v888 = vand.u32 %v186, 4294901760
    %v889 = vsub.f32 %v186, %v888
    %v890 = vand.u32 %v889, 4294901760
    %891 = vmatpush.msra.mxu0 %v890
    %v892 = vand.u32 %v100, 4294901760
    %893 = vmatmul.f32.gmra.mxu0 %v892
    %v894 = vpop.f32.mrf.mxu0
    %v895 = vadd.f32 %v826, %v894
    %896 = vdwg.mxu0
    %v897 = vand.u32 %v201, 4294901760
    %898 = vmatpush.msra.mxu0 %v897
    %v899 = vand.u32 %v200, 4294901760
    %900 = vmatpush.msra.mxu0 %v899
    %v901 = vand.u32 %v199, 4294901760
    %902 = vmatpush.msra.mxu0 %v901
    %v903 = vand.u32 %v198, 4294901760
    %904 = vmatpush.msra.mxu0 %v903
    %v905 = vand.u32 %v197, 4294901760
    %906 = vmatpush.msra.mxu0 %v905
    %v907 = vand.u32 %v196, 4294901760
    %908 = vmatpush.msra.mxu0 %v907
    %v909 = vand.u32 %v195, 4294901760
    %910 = vmatpush.msra.mxu0 %v909
    %v911 = vand.u32 %v194, 4294901760
    %912 = vmatpush.msra.mxu0 %v911
    %v913 = vand.u32 %v193, 4294901760
    %914 = vmatpush.msra.mxu0 %v913
    %v915 = vand.u32 %v192, 4294901760
    %916 = vmatpush.msra.mxu0 %v915
    %v917 = vand.u32 %v191, 4294901760
    %918 = vmatpush.msra.mxu0 %v917
    %v919 = vand.u32 %v190, 4294901760
    %920 = vmatpush.msra.mxu0 %v919
    %v921 = vand.u32 %v189, 4294901760
    %922 = vmatpush.msra.mxu0 %v921
    %v923 = vand.u32 %v188, 4294901760
    %924 = vmatpush.msra.mxu0 %v923
    %v925 = vand.u32 %v187, 4294901760
    %926 = vmatpush.msra.mxu0 %v925
    %v927 = vand.u32 %v186, 4294901760
    %928 = vmatpush.msra.mxu0 %v927
    %v929 = vand.u32 %v100, 4294901760
    %930 = vmatmul.f32.gmra.mxu0 %v929
    %v931 = vpop.f32.mrf.mxu0
    %v932 = vadd.f32 %v895, %v931
    %933 = vdwg.mxu0
    %vm934 = vcmask 64512
    %935 = vst.msk [vmem:[#allocation7] sm:$0xff] %vm934, %v932
    // Predicated region
    $region18: #{tpu_custom_call.1} parent=1 // pred_check
      _
    $region19: #{tpu_custom_call.1} parent=1 // pred_check_branch
      %937 = sbr.rel (0) target = $region21
    $region20: #{tpu_custom_call.1} parent=1 // pred_region
      %939 = vsyncadd [#allocation4], 112
      %s940 = sshll.u32 [#allocation7], 4
      %s941 = int_to_ptr.vmem [resolvable:$true] %s940
      %s942 = sshll.u32 %s2, 4
      %s943 = int_to_ptr.hbm [resolvable:$true] %s942
      %948 = dma.vmem_to_hbm [thread:$0]  %s941, 16, %s943, [#allocation4], 16, 16, 1
    $region21: #{tpu_custom_call.1} parent=1 // pred_fallthru
      _
    // Predicated region
    $region22: #{tpu_custom_call.1} parent=1 // pred_check
      _
    $region23: #{tpu_custom_call.1} parent=1 // pred_check_branch
      %950 = sbr.rel (0) target = $region25
    $region24: #{tpu_custom_call.1} parent=1 // pred_region
      %952 = dma.done [#allocation4], 128
    $region25: #{tpu_custom_call.1} parent=1 // pred_fallthru
      _
    %953 = vsyncpa [#allocation3], 1
    %954 = vsyncpa [#allocation6], 1
    %955 = vsyncpa [#allocation4], 1

</llo_original>
